<compile_context>
chip_gen: v6e
topology: v6e:2x2x1
jax: 0.10.0
libtpu: 0.0.40
codegen_flags: <defaults>
</compile_context>

<pallas_src>
import functools

import numpy as np

import jax
import jax.numpy as jnp
from jax.experimental import pallas as pl
from jax.experimental.pallas import tpu as pltpu


# ----------------------------- Pallas kernel ---------------------------------

def _odefunc_kernel(a1_ref, w1_ref, w2_ref, mask_ref, o_ref, *, Wp, Ppad):
    """Fused relu(conv3x3(x, W1)) -> conv3x3(., W2) for one batch element.

    a1_ref  : (9*Cin, Ppad)  bf16  tap-im2col'd, spatially padded, flat input
    w1_ref  : (Cmid, 9*Cin)  bf16  conv1 weight, tap-major columns
    w2_ref  : (Cout, 9*Cmid) bf16  blended block weight, tap-major columns
    mask_ref: (1, Ppad)      f32   1.0 on the valid HxW interior, 0.0 elsewhere
    o_ref   : (Cout, Ppad)   f32   conv2 output on the flat padded grid
    """
    # ---- stage 1: relu(conv1(x)) as ONE K = 9*Cin MXU push -------------------
    mid = jnp.dot(w1_ref[...], a1_ref[...],
                  preferred_element_type=jnp.float32)            # (Cmid, Ppad)
    # relu, then zero every flat position outside the valid HxW interior.  The
    # zeroed positions become the 1-pixel zero halo conv2 needs once the taps
    # are rotated below, so no padded scratch buffer / zero-fill is required.
    mid = jnp.maximum(mid, 0.0) * mask_ref[...]

    # ---- stage 2: blended conv2 as ONE K = 9*Cmid MXU push --------------------
    # Tap (kh, kw) of the zero-padded relu output is a pure lane rotation of
    # `mid` by (Wp + 1) - (kh*Wp + kw)  (the re-centering shift folded in).
    taps = []
    for kh in range(3):
        for kw in range(3):
            s = (Wp + 1 - (kh * Wp + kw)) % Ppad
            taps.append(mid if s == 0 else pltpu.roll(mid, s, 1))
    a2 = jnp.concatenate(taps, axis=0).astype(jnp.bfloat16)      # (9*Cmid, Ppad)
    out = jnp.dot(w2_ref[...], a2,
                  preferred_element_type=jnp.float32)            # (Cout, Ppad)
    o_ref[...] = out.astype(o_ref.dtype)


# ----------------------------- wrapper ----------------------------------------

def _weight_to_tapmat(w_oihw):
    """(Cout, Cin, 3, 3) -> (Cout, 9*Cin) bf16, column index = (kh*3+kw)*Cin+ci."""
    co, ci = w_oihw.shape[0], w_oihw.shape[1]
    return jnp.transpose(w_oihw, (0, 2, 3, 1)).reshape(co, 9 * ci).astype(jnp.bfloat16)


def rkhs_odefunc_forward(t, x_nchw, params, num_steps):
    """Pallas implementation of RKHS_ODEfunc.forward(t, x). NCHW in, NCHW f32 out."""
    ns = num_steps
    k = int(t * ns - 1)                             # same as the torch code
    w1_oihw = params["conv1_w"]                     # (dim_int, dim, 3, 3)
    blocks = params["block_w"]                      # (ns + 1, dim, dim_int, 3, 3)
    if k < ns:
        c1 = 1.0 - t * ns + k
        c2 = t * ns - k
        # conv is linear in the weight -> fold the interpolation into ONE conv
        w2_oihw = c1 * blocks[k] + c2 * blocks[k + 1]
    else:
        w2_oihw = blocks[k]

    N, Cin, H, W = x_nchw.shape
    Cmid = w1_oihw.shape[0]
    Cout = w2_oihw.shape[0]
    Hp, Wp = H + 2, W + 2
    P = Hp * Wp
    Ppad = ((P + 127) // 128) * 128                 # lane-dense flat spatial dim

    # ---- activations: NCHW -> channels-first flat-spatial, bf16, tap-im2col ---
    xf = jnp.pad(x_nchw.astype(jnp.bfloat16),
                 ((0, 0), (0, 0), (1, 1), (1, 1))).reshape(N, Cin, P)
    xf = jnp.pad(xf, ((0, 0), (0, 0), (0, Ppad - P)))
    # 9 shifted copies of the tiny Cin-channel image (few KB total): stage-1
    # taps become a single K=36 contraction inside the kernel.
    a1 = jnp.stack([jnp.roll(xf, -(kh * Wp + kw), axis=-1)
                    for kh in range(3) for kw in range(3)], axis=1)
    a1 = a1.reshape(N, 9 * Cin, Ppad)               # (N, 36, Ppad) bf16

    # ---- weights ---------------------------------------------------------------
    w1_mat = _weight_to_tapmat(w1_oihw)             # (Cmid, 9*Cin)
    w2_mat = _weight_to_tapmat(w2_oihw)             # (Cout, 9*Cmid)

    # ---- static interior-validity mask over the padded flat grid --------------
    pidx = np.arange(Ppad)
    mask_np = ((pidx // Wp < H) & (pidx % Wp < W)).astype(np.float32)
    mask = jnp.asarray(mask_np).reshape(1, Ppad)

    kernel = functools.partial(_odefunc_kernel, Wp=Wp, Ppad=Ppad)
    out_flat = pl.pallas_call(
        kernel,
        out_shape=jax.ShapeDtypeStruct((N, Cout, Ppad), jnp.float32),
        grid_spec=pltpu.PrefetchScalarGridSpec(
            num_scalar_prefetch=0,
            grid=(N,),
            in_specs=[
                pl.BlockSpec((None, 9 * Cin, Ppad), lambda n: (n, 0, 0)),
                pl.BlockSpec((Cmid, 9 * Cin), lambda n: (0, 0)),
                pl.BlockSpec((Cout, 9 * Cmid), lambda n: (0, 0)),
                pl.BlockSpec((1, Ppad), lambda n: (0, 0)),
            ],
            out_specs=pl.BlockSpec((None, Cout, Ppad), lambda n: (n, 0, 0)),
        ),
        compiler_params=pltpu.CompilerParams(
            dimension_semantics=("parallel",)),     # 2-way TC split on v7x
    )(a1, w1_mat, w2_mat, mask)

    # valid conv outputs live at flat position i*Wp + j (top-left aligned);
    # extraction is a tiny contiguous slice, output stays NCHW (no transpose).
    out = out_flat[:, :, :P].reshape(N, Cout, Hp, Wp)[:, :, :H, :W]
    return out


# ----------------------------- pure-JAX reference -----------------------------

def _reference_forward(t, x_nchw, params, num_steps):
    ns = num_steps
    k = int(t * ns - 1)
    w1 = params["conv1_w"]
    if k < ns:
        c1 = 1.0 - t * ns + k
        c2 = t * ns - k
        w2 = c1 * params["block_w"][k] + c2 * params["block_w"][k + 1]
    else:
        w2 = params["block_w"][k]
    x = jnp.transpose(x_nchw, (0, 2, 3, 1)).astype(jnp.float32)
    w1_hwio = jnp.transpose(w1, (2, 3, 1, 0)).astype(jnp.bfloat16)
    w2_hwio = jnp.transpose(w2, (2, 3, 1, 0)).astype(jnp.bfloat16)
    dn = ('NHWC', 'HWIO', 'NHWC')
    mid = jax.lax.conv_general_dilated(
        x.astype(jnp.bfloat16), w1_hwio, (1, 1), ((1, 1), (1, 1)),
        dimension_numbers=dn, preferred_element_type=jnp.float32)
    mid = jnp.maximum(mid, 0.0)
    out = jax.lax.conv_general_dilated(
        mid.astype(jnp.bfloat16), w2_hwio, (1, 1), ((1, 1), (1, 1)),
        dimension_numbers=dn, preferred_element_type=jnp.float32)
    return jnp.transpose(out, (0, 3, 1, 2))


# ----------------------------- main -------------------------------------------

if __name__ == "__main__":
    N, DIM, DIM_INT, HS, WS = 2, 4, 32, 16, 16
    NUM_STEPS = 10

    key = jax.random.PRNGKey(0)
    kx, k1, k2 = jax.random.split(key, 3)
    x = jax.random.normal(kx, (N, DIM, HS, WS), jnp.float32)
    params = {
        # matches torch init: randn(dim_int, dim, 3, 3) / (3*dim_int)**0.5
        "conv1_w": jax.random.normal(k1, (DIM_INT, DIM, 3, 3), jnp.float32)
                   / (3.0 * DIM_INT) ** 0.5,
        # zero_init=True would make the output identically zero; use random
        # block weights (the non-zero / Omega path) so the test is non-trivial.
        "block_w": jax.random.normal(k2, (NUM_STEPS + 1, DIM, DIM_INT, 3, 3),
                                     jnp.float32) / (3.0 * DIM) ** 0.5,
    }

    # t = 0.45 exercises the interpolation branch (k < num_steps);
    # t = 1.1  exercises the terminal branch      (k == num_steps).
    for t in (0.45, 1.1):
        fwd = jax.jit(lambda inp, _t=t: rkhs_odefunc_forward(_t, inp, params,
                                                             NUM_STEPS))
        out = fwd(x)
        jax.block_until_ready(out)
        assert out.shape == (N, DIM, HS, WS)
        ref = _reference_forward(t, x, params, NUM_STEPS)
        err = float(jnp.max(jnp.abs(out - ref)))
        scale = float(jnp.max(jnp.abs(ref))) + 1e-6
        assert err <= 1e-2 * scale + 1e-3, ("mismatch", t, err, scale)

    print("KERNEL_OK")
</pallas_src>

<mosaic_0001>
module attributes {stable_mosaic.version = 11 : i64} {
  func.func @_odefunc_kernel(%arg0: i32, %arg1: memref<1x36x384xbf16, #tpu.memory_space<vmem>>, %arg2: memref<32x36xbf16, #tpu.memory_space<vmem>>, %arg3: memref<4x288xbf16, #tpu.memory_space<vmem>>, %arg4: memref<1x384xf32, #tpu.memory_space<vmem>>, %arg5: memref<1x4x384xf32, #tpu.memory_space<vmem>>) attributes {dimension_semantics = [#tpu.dimension_semantics<parallel>], iteration_bounds = array<i64: 2>, scalar_prefetch = 0 : i64, scratch_operands = 0 : i64, tpu.core_type = #tpu.core_type<tc>, window_params = [{transform_indices = @transform_0, window_bounds = array<i64: 1, 36, 384>}, {pipeline_mode = #tpu.pipeline_mode<synchronous>, transform_indices = @transform_1, window_bounds = array<i64: 32, 36>}, {pipeline_mode = #tpu.pipeline_mode<synchronous>, transform_indices = @transform_2, window_bounds = array<i64: 4, 288>}, {pipeline_mode = #tpu.pipeline_mode<synchronous>, transform_indices = @transform_3, window_bounds = array<i64: 1, 384>}, {transform_indices = @transform_4, window_bounds = array<i64: 1, 4, 384>}]} {
    %c0 = arith.constant 0 : index
    %c0_0 = arith.constant 0 : index
    %0 = vector.load %arg2[%c0, %c0_0] : memref<32x36xbf16, #tpu.memory_space<vmem>>, vector<32x36xbf16>
    %c0_1 = arith.constant 0 : index
    %c0_2 = arith.constant 0 : index
    %c0_3 = arith.constant 0 : index
    %1 = vector.load %arg1[%c0_1, %c0_2, %c0_3] : memref<1x36x384xbf16, #tpu.memory_space<vmem>>, vector<1x36x384xbf16>
    %2 = vector.shape_cast %1 : vector<1x36x384xbf16> to vector<36x384xbf16>
    %cst = arith.constant dense<0.000000e+00> : vector<32x384xf32>
    %3 = tpu.matmul %0, %2, %cst {dimension_numbers = #tpu.dot_dimension_numbers<[1], [0], [0], [1], [0, 0, 1, 1], [], []>} : vector<32x36xbf16>, vector<36x384xbf16>, vector<32x384xf32> -> vector<32x384xf32>
    %cst_4 = arith.constant 0.000000e+00 : f32
    %4 = vector.broadcast %cst_4 : f32 to vector<32x384xf32>
    %5 = arith.maximumf %3, %4 : vector<32x384xf32>
    %c0_5 = arith.constant 0 : index
    %c0_6 = arith.constant 0 : index
    %6 = vector.load %arg4[%c0_5, %c0_6] : memref<1x384xf32, #tpu.memory_space<vmem>>, vector<1x384xf32>
    %7 = vector.broadcast %6 : vector<1x384xf32> to vector<32x384xf32>
    %8 = arith.mulf %5, %7 : vector<32x384xf32>
    %c19_i32 = arith.constant 19 : i32
    %9 = tpu.dynamic_rotate %8 by %c19_i32 dim 1 : vector<32x384xf32>, i32 -> vector<32x384xf32>
    %c18_i32 = arith.constant 18 : i32
    %10 = tpu.dynamic_rotate %8 by %c18_i32 dim 1 : vector<32x384xf32>, i32 -> vector<32x384xf32>
    %c17_i32 = arith.constant 17 : i32
    %11 = tpu.dynamic_rotate %8 by %c17_i32 dim 1 : vector<32x384xf32>, i32 -> vector<32x384xf32>
    %c1_i32 = arith.constant 1 : i32
    %12 = tpu.dynamic_rotate %8 by %c1_i32 dim 1 : vector<32x384xf32>, i32 -> vector<32x384xf32>
    %c383_i32 = arith.constant 383 : i32
    %13 = tpu.dynamic_rotate %8 by %c383_i32 dim 1 : vector<32x384xf32>, i32 -> vector<32x384xf32>
    %c367_i32 = arith.constant 367 : i32
    %14 = tpu.dynamic_rotate %8 by %c367_i32 dim 1 : vector<32x384xf32>, i32 -> vector<32x384xf32>
    %c366_i32 = arith.constant 366 : i32
    %15 = tpu.dynamic_rotate %8 by %c366_i32 dim 1 : vector<32x384xf32>, i32 -> vector<32x384xf32>
    %c365_i32 = arith.constant 365 : i32
    %16 = tpu.dynamic_rotate %8 by %c365_i32 dim 1 : vector<32x384xf32>, i32 -> vector<32x384xf32>
    %17 = tpu.concatenate %9, %10, %11, %12, %8, %13, %14, %15, %16 in 0 : vector<32x384xf32>, vector<32x384xf32>, vector<32x384xf32>, vector<32x384xf32>, vector<32x384xf32>, vector<32x384xf32>, vector<32x384xf32>, vector<32x384xf32>, vector<32x384xf32> -> vector<288x384xf32>
    %18 = arith.truncf %17 : vector<288x384xf32> to vector<288x384xbf16>
    %c0_7 = arith.constant 0 : index
    %c0_8 = arith.constant 0 : index
    %19 = vector.load %arg3[%c0_7, %c0_8] : memref<4x288xbf16, #tpu.memory_space<vmem>>, vector<4x288xbf16>
    %cst_9 = arith.constant dense<0.000000e+00> : vector<4x384xf32>
    %20 = tpu.matmul %19, %18, %cst_9 {dimension_numbers = #tpu.dot_dimension_numbers<[1], [0], [0], [1], [0, 0, 1, 1], [], []>} : vector<4x288xbf16>, vector<288x384xbf16>, vector<4x384xf32> -> vector<4x384xf32>
    %c0_10 = arith.constant 0 : index
    %c0_11 = arith.constant 0 : index
    %c0_12 = arith.constant 0 : index
    %21 = vector.load %arg5[%c0_10, %c0_11, %c0_12] : memref<1x4x384xf32, #tpu.memory_space<vmem>>, vector<1x4x384xf32>
    %22 = vector.shape_cast %21 : vector<1x4x384xf32> to vector<4x384xf32>
    %23 = vector.shape_cast %20 : vector<4x384xf32> to vector<1x4x384xf32>
    tpu.vector_store %arg5[%c0_10, %c0_11, %c0_12], %23 {strides = array<i32>} : memref<1x4x384xf32, #tpu.memory_space<vmem>>, vector<1x4x384xf32>,
    return
  }
  func.func @transform_0(%arg0: i32) -> (i32, i32, i32) {
    %c0_i32 = arith.constant 0 : i32
    %c0_i32_0 = arith.constant 0 : i32
    %c0_i32_1 = arith.constant 0 : i32
    return %arg0, %c0_i32, %c0_i32_0 : i32, i32, i32
  }
  func.func @transform_1(%arg0: i32) -> (i32, i32) {
    %c0_i32 = arith.constant 0 : i32
    %c0_i32_0 = arith.constant 0 : i32
    %c0_i32_1 = arith.constant 0 : i32
    return %c0_i32, %c0_i32_0 : i32, i32
  }
  func.func @transform_2(%arg0: i32) -> (i32, i32) {
    %c0_i32 = arith.constant 0 : i32
    %c0_i32_0 = arith.constant 0 : i32
    %c0_i32_1 = arith.constant 0 : i32
    return %c0_i32, %c0_i32_0 : i32, i32
  }
  func.func @transform_3(%arg0: i32) -> (i32, i32) {
    %c0_i32 = arith.constant 0 : i32
    %c0_i32_0 = arith.constant 0 : i32
    %c0_i32_1 = arith.constant 0 : i32
    return %c0_i32, %c0_i32_0 : i32, i32
  }
  func.func @transform_4(%arg0: i32) -> (i32, i32, i32) {
    %c0_i32 = arith.constant 0 : i32
    %c0_i32_0 = arith.constant 0 : i32
    %c0_i32_1 = arith.constant 0 : i32
    return %arg0, %c0_i32, %c0_i32_0 : i32, i32, i32
  }
}

</mosaic_0001>

<llo_original>
// kernel: _lambda_.1
$region0: #{_lambda_.1}
  #allocation0 [shape = 'u32[]', space=smem, size = 0x4, offset = 0x4, fixed_abs, tag = 'smem constant byte address 0x4 - core index']
  #allocation1 [shape = 'u32[144,128]{1,0:T(1,128)}', space=vmem, size = 0x12000, scoped, tag = 'internal scratch']
  %s0 = inlined_call_operand.vmem [shape: bf16[2,36,384], index: 0, kind: input, shape index: {}]
  %s1 = inlined_call_operand.vmem [shape: bf16[32,36], index: 1, kind: input, shape index: {}]
  %s2 = inlined_call_operand.vmem [shape: bf16[4,288], index: 2, kind: input, shape index: {}]
  %s3 = inlined_call_operand.vmem [shape: f32[1,384], index: 3, kind: input, shape index: {}]
  %s4 = inlined_call_operand.vmem [shape: f32[2,4,384], index: 4, kind: output, shape index: {}]
  %s5 = sld [smem:[#allocation0]]
  $region49: #{_lambda_.1} parent=0
    _
  %s7 = ssub.s32 1, %s5
  %s8 = scalar_select 0, %s7, %s5
  loop: start=0, step=1, limit=4
  $region2: #{_lambda_.1} parent=0 // loop_pre_header
    _
  $region3: #{_lambda_.1} parent=0 // loop_header
    %s10 = sphi 0, %s14
    %p11 = scmp.ge.s32.totalorder %s10, 4
    %s20 = sphi 0, %s22
    %s23 = sphi 0, %s20
    %s24 = sphi 0, %s23
    %s40 = sphi 0, %s24
    %s44 = sphi 0, %s44
    %s46 = sphi 0, %s44
    %s47 = sphi 0, %s46
    %s61 = sphi 0, %s47
    %s65 = sphi 0, %s65
    %s67 = sphi 0, %s65
    %s68 = sphi 0, %s67
    %s82 = sphi 0, %s68
    %s86 = sphi 0, %s86
    %s88 = sphi 0, %s86
    %s89 = sphi 0, %s88
    %s103 = sphi 0, %s89
    %s109 = sphi 0, %s111
    %s112 = sphi 0, %s109
    %s113 = sphi 0, %s112
    %s129 = sphi 0, %s113
  $region4: #{_lambda_.1} parent=0 // loop_header_branch
    %13 = sbr.rel (%p11) target = $region8
  $region5: #{_lambda_.1} parent=0 // loop_body
    %s15 = ssub.s32 %s10, 1
    %s16 = ssub.s32 %s10, 2
    %s17 = sadd.s32 %s10, 1
    %s18 = ssub.s32 %s10, %s17
    %p19 = scmp.eq.s32.totalorder %s18, 0
    %s21 = sadd.s32 %s20, 1
    %s22 = scalar_select %p19, %s20, %s21
    %p25 = pneg %p19
    %p26 = scmp.eq.s32.totalorder %s10, 1
    %p27 = por %p25, %p26
    %p28 = scmp.ne.s32.totalorder %s20, %s23
    %p29 = scmp.eq.s32.totalorder %s10, 0
    %p30 = por %p28, %p29
    %p31 = scmp.ne.s32.totalorder %s20, %s23
    %p32 = scmp.eq.s32.totalorder %s15, 1
    %p33 = por %p31, %p32
    %p34 = scmp.ne.s32.totalorder %s23, %s24
    %p35 = scmp.eq.s32.totalorder %s15, 0
    %p36 = por %p34, %p35
    %p37 = scmp.ne.s32.totalorder %s23, %s24
    %p38 = scmp.eq.s32.totalorder %s16, 1
    %p39 = por %p37, %p38
    %p41 = scmp.ne.s32.totalorder %s24, %s40
    %p42 = scmp.eq.s32.totalorder %s16, 0
    %p43 = por %p41, %p42
    %s45 = sadd.s32 %s44, 1
    %p48 = scmp.eq.s32.totalorder %s10, 1
    %p49 = scmp.ne.s32.totalorder %s44, %s46
    %p50 = scmp.eq.s32.totalorder %s10, 0
    %p51 = por %p49, %p50
    %p52 = scmp.ne.s32.totalorder %s44, %s46
    %p53 = scmp.eq.s32.totalorder %s15, 1
    %p54 = por %p52, %p53
    %p55 = scmp.ne.s32.totalorder %s46, %s47
    %p56 = scmp.eq.s32.totalorder %s15, 0
    %p57 = por %p55, %p56
    %p58 = scmp.ne.s32.totalorder %s46, %s47
    %p59 = scmp.eq.s32.totalorder %s16, 1
    %p60 = por %p58, %p59
    %p62 = scmp.ne.s32.totalorder %s47, %s61
    %p63 = scmp.eq.s32.totalorder %s16, 0
    %p64 = por %p62, %p63
    %s66 = sadd.s32 %s65, 1
    %p69 = scmp.eq.s32.totalorder %s10, 1
    %p70 = scmp.ne.s32.totalorder %s65, %s67
    %p71 = scmp.eq.s32.totalorder %s10, 0
    %p72 = por %p70, %p71
    %p73 = scmp.ne.s32.totalorder %s65, %s67
    %p74 = scmp.eq.s32.totalorder %s15, 1
    %p75 = por %p73, %p74
    %p76 = scmp.ne.s32.totalorder %s67, %s68
    %p77 = scmp.eq.s32.totalorder %s15, 0
    %p78 = por %p76, %p77
    %p79 = scmp.ne.s32.totalorder %s67, %s68
    %p80 = scmp.eq.s32.totalorder %s16, 1
    %p81 = por %p79, %p80
    %p83 = scmp.ne.s32.totalorder %s68, %s82
    %p84 = scmp.eq.s32.totalorder %s16, 0
    %p85 = por %p83, %p84
    %s87 = sadd.s32 %s86, 1
    %p90 = scmp.eq.s32.totalorder %s10, 1
    %p91 = scmp.ne.s32.totalorder %s86, %s88
    %p92 = scmp.eq.s32.totalorder %s10, 0
    %p93 = por %p91, %p92
    %p94 = scmp.ne.s32.totalorder %s86, %s88
    %p95 = scmp.eq.s32.totalorder %s15, 1
    %p96 = por %p94, %p95
    %p97 = scmp.ne.s32.totalorder %s88, %s89
    %p98 = scmp.eq.s32.totalorder %s15, 0
    %p99 = por %p97, %p98
    %p100 = scmp.ne.s32.totalorder %s88, %s89
    %p101 = scmp.eq.s32.totalorder %s16, 1
    %p102 = por %p100, %p101
    %p104 = scmp.ne.s32.totalorder %s89, %s103
    %p105 = scmp.eq.s32.totalorder %s16, 0
    %p106 = por %p104, %p105
    %s107 = ssub.s32 %s10, %s17
    %p108 = scmp.eq.s32.totalorder %s107, 0
    %s110 = sadd.s32 %s109, 1
    %s111 = scalar_select %p108, %s109, %s110
    %p114 = pneg %p108
    %p115 = scmp.eq.s32.totalorder %s10, 1
    %p116 = por %p114, %p115
    %p117 = scmp.ne.s32.totalorder %s109, %s112
    %p118 = scmp.eq.s32.totalorder %s10, 0
    %p119 = por %p117, %p118
    %p120 = scmp.ne.s32.totalorder %s109, %s112
    %p121 = scmp.eq.s32.totalorder %s15, 1
    %p122 = por %p120, %p121
    %p123 = scmp.ne.s32.totalorder %s112, %s113
    %p124 = scmp.eq.s32.totalorder %s15, 0
    %p125 = por %p123, %p124
    %p126 = scmp.ne.s32.totalorder %s112, %s113
    %p127 = scmp.eq.s32.totalorder %s16, 1
    %p128 = por %p126, %p127
    %p130 = scmp.ne.s32.totalorder %s113, %s129
    %p131 = scmp.eq.s32.totalorder %s16, 0
    %p132 = por %p130, %p131
    %p133 = scmp.le.s32.totalorder 1, %s10
    %p134 = scmp.lt.s32.totalorder %s10, 3
    %p135 = pnand %p133, %p134
    %p136 = pneg %p135
    // Predicated region
    $region9: #{_lambda_.1} parent=5 // pred_check
      _
    $region10: #{_lambda_.1} parent=5 // pred_check_branch
      %138 = sbr.rel (%p135) target = $region12
    $region11: #{_lambda_.1} parent=5 // pred_region
      %s139 = ssub.s32 %s10, 1
      // Predicated region
      $region13: #{_lambda_.1} parent=11 // pred_check
        %p140 = pneg %p57
      $region14: #{_lambda_.1} parent=11 // pred_check_branch
        %142 = sbr.rel (%p140) target = $region16
      $region15: #{_lambda_.1} parent=11 // pred_region
        _
      $region16: #{_lambda_.1} parent=11 // pred_fallthru
        _
      // Predicated region
      $region17: #{_lambda_.1} parent=11 // pred_check
        %p143 = pneg %p78
      $region18: #{_lambda_.1} parent=11 // pred_check_branch
        %145 = sbr.rel (%p143) target = $region20
      $region19: #{_lambda_.1} parent=11 // pred_region
        _
      $region20: #{_lambda_.1} parent=11 // pred_fallthru
        _
      // Predicated region
      $region21: #{_lambda_.1} parent=11 // pred_check
        %p146 = pneg %p99
      $region22: #{_lambda_.1} parent=11 // pred_check_branch
        %148 = sbr.rel (%p146) target = $region24
      $region23: #{_lambda_.1} parent=11 // pred_region
        _
      $region24: #{_lambda_.1} parent=11 // pred_fallthru
        _
    $region12: #{_lambda_.1} parent=5 // pred_fallthru
      _
    %p149 = scmp.lt.s32.totalorder %s10, 2
    // Predicated region
    $region25: #{_lambda_.1} parent=5 // pred_check
      %p150 = pneg %p149
    $region26: #{_lambda_.1} parent=5 // pred_check_branch
      %152 = sbr.rel (%p150) target = $region28
    $region27: #{_lambda_.1} parent=5 // pred_region
      // Predicated region
      $region29: #{_lambda_.1} parent=27 // pred_check
        %p153 = pneg %p30
      $region30: #{_lambda_.1} parent=27 // pred_check_branch
        %155 = sbr.rel (%p153) target = $region32
      $region31: #{_lambda_.1} parent=27 // pred_region
        %p156 = scmp.lt.s32.totalorder %s10, 1
        %s157 = scalar_select %p156, %s10, 1
        %s158 = smul.addr %s157, 15
        %s159 = smul.addr %s158, 4
        %s160 = scalar_lea.vmem %s0, %s159
      $region32: #{_lambda_.1} parent=27 // pred_fallthru
        _
    $region28: #{_lambda_.1} parent=5 // pred_fallthru
      _
    %p161 = scmp.le.s32.totalorder 1, %s10
    %p162 = scmp.lt.s32.totalorder %s10, 3
    %p163 = pnand %p161, %p162
    %p164 = pneg %p163
    // Predicated region
    $region33: #{_lambda_.1} parent=5 // pred_check
      _
    $region34: #{_lambda_.1} parent=5 // pred_check_branch
      %166 = sbr.rel (%p163) target = $region36
    $region35: #{_lambda_.1} parent=5 // pred_region
      %s167 = ssub.s32 %s10, 1
      %p168 = scmp.lt.s32.totalorder %s15, 1
      %s169 = scalar_select %p168, %s15, 1
      %s170 = smul.addr %s169, 15
      %s171 = smul.addr %s170, 4
      %s172 = scalar_lea.vmem %s0, %s171
      %p173 = pneg %p36
      %p174 = pneg %p33
      %p175 = pneg %p57
      %p176 = pneg %p54
      %p177 = pneg %p78
      %p178 = pneg %p75
      %p179 = pneg %p99
      %p180 = pneg %p96
      %p181 = pneg %p125
      %p182 = pneg %p122
      %p183 = scmp.lt.s32.totalorder %s15, 1
      %s184 = scalar_select %p183, %s15, 1
      %s185 = smul.addr %s184, 3
      %s186 = smul.addr %s185, 4
      %s187 = scalar_lea.vmem %s4, %s186
      %p188 = scmp.lt.s32.totalorder %s15, 1
      %s189 = scalar_select %p188, %s15, 1
      %s190 = smul.addr %s189, 15
      %s191 = smul.addr %s190, 4
      %s192 = scalar_lea.vmem %s0, %s191
      %p193 = scmp.lt.s32.totalorder %s15, 1
      %s194 = scalar_select %p193, %s15, 1
      %s195 = smul.addr %s194, 3
      %s196 = smul.addr %s195, 4
      %s197 = scalar_lea.vmem %s4, %s196
      %v199 = vld [vmem:[%s1] sm:$0xf]
      %v200 = vld [vmem:[%s1 + $0x4] sm:$0xf]
      %v201 = vld [vmem:[%s1 + $0x8] sm:$0xf]
      %v202 = vld [vmem:[%s1 + $0xc] sm:$0xf]
      %v203 = vld [vmem:[%s192] sm:$0xff]
      %v204 = vld [vmem:[%s192 + $0x8] sm:$0xf]
      %v205 = vld [vmem:[%s192 + $0xc] sm:$0xff]
      %v206 = vld [vmem:[%s192 + $0x14] sm:$0xf]
      %v207 = vld [vmem:[%s192 + $0x18] sm:$0xff]
      %v208 = vld [vmem:[%s192 + $0x20] sm:$0xf]
      %v209 = vld [vmem:[%s192 + $0x24] sm:$0xff]
      %v210 = vld [vmem:[%s192 + $0x2c] sm:$0xf]
      %v211 = vld [vmem:[%s192 + $0x30] sm:$0x33]
      %v212 = vld [vmem:[%s192 + $0x38] sm:$0x3]
      %v217 = vunpack.c.l.b16 %v199
      %v218 = vunpack.c.l.b16 %v200
      %v219 = vunpack.c.l.b16 %v201
      %v220 = vunpack.c.l.b16 %v202
      %v221 = vpack.c.b16 %v218, %v217
      %v222 = vpack.c.b16 %v220, %v219
      %v233 = vunpack.c.l.b16 %v203
      %v234 = vunpack.c.h.b16 %v203
      %v235 = vunpack.c.l.b16 %v204
      %v236 = vunpack.c.l.b16 %v205
      %v237 = vunpack.c.h.b16 %v205
      %v238 = vunpack.c.l.b16 %v206
      %v239 = vunpack.c.l.b16 %v207
      %v240 = vunpack.c.h.b16 %v207
      %v241 = vunpack.c.l.b16 %v208
      %v242 = vunpack.c.l.b16 %v209
      %v243 = vunpack.c.h.b16 %v209
      %v244 = vunpack.c.l.b16 %v210
      %v245 = vunpack.c.l.b16 %v211
      %v246 = vunpack.c.h.b16 %v211
      %v247 = vunpack.c.l.b16 %v212
      %v248 = vpack.c.b16 %v236, %v233
      %v249 = vpack.c.b16 %v237, %v234
      %v250 = vpack.c.b16 %v238, %v235
      %v251 = vpack.c.b16 %v242, %v239
      %v252 = vpack.c.b16 %v243, %v240
      %v253 = vpack.c.b16 %v244, %v241
      %v254 = vpack.c.b16 %v245, %v245
      %v255 = vpack.c.b16 %v246, %v246
      %v256 = vpack.c.b16 %v247, %v247
      %vm263 = vcmask 293888
      %v265 = vsel %vm263, %v221, 0
      %v268 = vsel %vm263, %v222, 0
      %vm270 = vcmask 1041408
      %v272 = vsel %vm270, %v254, 0
      %v275 = vsel %vm270, %v255, 0
      %v278 = vsel %vm270, %v256, 0
      %280 = vmatprep.subr.bf16.mxu0 0
      %281 = vmatpush1.bf16.msra.mxu0 0
      %282 = vmatprep.subr.bf16.mxu0 0
      %283 = vmatpush1.bf16.msra.mxu0 0
      %284 = vmatprep.subr.bf16.mxu0 0
      %285 = vmatpush1.bf16.msra.mxu0 0
      %286 = vmatprep.subr.bf16.mxu0 0
      %287 = vmatpush1.bf16.msra.mxu0 0
      %288 = vmatprep.subr.bf16.mxu0 0
      %289 = vmatpush1.bf16.msra.mxu0 0
      %290 = vmatprep.subr.bf16.mxu0 %v275
      %291 = vmatpush1.bf16.msra.mxu0 %v272
      %292 = vmatprep.subr.bf16.mxu0 %v252
      %293 = vmatpush1.bf16.msra.mxu0 %v251
      %294 = vmatprep.subr.bf16.mxu0 %v249
      %295 = vmatpush1.bf16.msra.mxu0 %v248
      %296 = vmatprep.subr.bf16.mxu0 0
      %297 = vmatpush2.bf16.msra.mxu0 0
      %298 = vmatprep.subr.bf16.mxu0 0
      %299 = vmatpush2.bf16.msra.mxu0 0
      %300 = vmatprep.subr.bf16.mxu0 0
      %301 = vmatpush2.bf16.msra.mxu0 0
      %302 = vmatprep.subr.bf16.mxu0 0
      %303 = vmatpush2.bf16.msra.mxu0 0
      %304 = vmatprep.subr.bf16.mxu0 0
      %305 = vmatpush2.bf16.msra.mxu0 0
      %306 = vmatprep.subr.bf16.mxu0 0
      %307 = vmatpush2.bf16.msra.mxu0 0
      %308 = vmatprep.subr.bf16.mxu0 0
      %309 = vmatpush2.bf16.msra.mxu0 0
      %310 = vmatprep.subr.bf16.mxu0 0
      %311 = vmatpush2.bf16.msra.mxu0 0
      %312 = vmatprep.mubr.bf16.mxu0 0
      %313 = vmatmul.mubr.bf16.gmra.mxu0 %v265
      %v314 = vpop.f32.mrf.mxu0
      %v315 = vadd.f32 0.0, %v314
      %v316 = vpop.f32.mrf.mxu0
      %v317 = vadd.f32 0.0, %v316
      %v318 = vpop.f32.mrf.mxu0
      %v319 = vadd.f32 0.0, %v318
      %v320 = vpop.f32.mrf.mxu0
      %v321 = vadd.f32 0.0, %v320
      %322 = vmatprep.mubr.bf16.mxu0 0
      %323 = vmatmul.mubr.bf16.gmra.mxu0 %v268
      %v324 = vpop.f32.mrf.mxu0
      %v325 = vadd.f32 0.0, %v324
      %v326 = vpop.f32.mrf.mxu0
      %v327 = vadd.f32 0.0, %v326
      %v328 = vpop.f32.mrf.mxu0
      %v329 = vadd.f32 0.0, %v328
      %v330 = vpop.f32.mrf.mxu0
      %v331 = vadd.f32 0.0, %v330
      %332 = vdwg.mxu0
      %333 = vmatprep.subr.bf16.mxu0 0
      %334 = vmatpush1.bf16.msra.mxu0 0
      %335 = vmatprep.subr.bf16.mxu0 0
      %336 = vmatpush1.bf16.msra.mxu0 0
      %337 = vmatprep.subr.bf16.mxu0 0
      %338 = vmatpush1.bf16.msra.mxu0 0
      %339 = vmatprep.subr.bf16.mxu0 0
      %340 = vmatpush1.bf16.msra.mxu0 0
      %341 = vmatprep.subr.bf16.mxu0 0
      %342 = vmatpush1.bf16.msra.mxu0 0
      %343 = vmatprep.subr.bf16.mxu0 0
      %344 = vmatpush1.bf16.msra.mxu0 %v278
      %345 = vmatprep.subr.bf16.mxu0 0
      %346 = vmatpush1.bf16.msra.mxu0 %v253
      %347 = vmatprep.subr.bf16.mxu0 0
      %348 = vmatpush1.bf16.msra.mxu0 %v250
      %349 = vmatprep.subr.bf16.mxu0 0
      %350 = vmatpush2.bf16.msra.mxu0 0
      %351 = vmatprep.subr.bf16.mxu0 0
      %352 = vmatpush2.bf16.msra.mxu0 0
      %353 = vmatprep.subr.bf16.mxu0 0
      %354 = vmatpush2.bf16.msra.mxu0 0
      %355 = vmatprep.subr.bf16.mxu0 0
      %356 = vmatpush2.bf16.msra.mxu0 0
      %357 = vmatprep.subr.bf16.mxu0 0
      %358 = vmatpush2.bf16.msra.mxu0 0
      %359 = vmatprep.subr.bf16.mxu0 0
      %360 = vmatpush2.bf16.msra.mxu0 0
      %361 = vmatprep.subr.bf16.mxu0 0
      %362 = vmatpush2.bf16.msra.mxu0 0
      %363 = vmatprep.subr.bf16.mxu0 0
      %364 = vmatpush2.bf16.msra.mxu0 0
      %365 = vmatprep.mubr.bf16.mxu0 0
      %366 = vmatmul.mubr.bf16.gmra.mxu0 %v265
      %v367 = vpop.f32.mrf.mxu0
      %v368 = vadd.f32 0.0, %v367
      %v369 = vpop.f32.mrf.mxu0
      %v370 = vpop.f32.mrf.mxu0
      %v371 = vadd.f32 0.0, %v370
      %v372 = vpop.f32.mrf.mxu0
      %373 = vmatprep.mubr.bf16.mxu0 0
      %374 = vmatmul.mubr.bf16.gmra.mxu0 %v268
      %v375 = vpop.f32.mrf.mxu0
      %v376 = vadd.f32 0.0, %v375
      %v377 = vpop.f32.mrf.mxu0
      %v378 = vpop.f32.mrf.mxu0
      %v379 = vadd.f32 0.0, %v378
      %v380 = vpop.f32.mrf.mxu0
      %381 = vdwg.mxu0
      %v382 = vmax.f32 %v315, 0.0
      %v383 = vmax.f32 %v317, 0.0
      %v384 = vmax.f32 %v368, 0.0
      %v385 = vmax.f32 %v319, 0.0
      %v386 = vmax.f32 %v321, 0.0
      %v387 = vmax.f32 %v371, 0.0
      %v388 = vmax.f32 %v325, 0.0
      %v389 = vmax.f32 %v327, 0.0
      %v390 = vmax.f32 %v376, 0.0
      %v391 = vmax.f32 %v329, 0.0
      %v392 = vmax.f32 %v331, 0.0
      %v393 = vmax.f32 %v379, 0.0
      %v394 = vld [vmem:[%s3] sm:$0x7]
      %v396 = vlaneseq
      %v397 = vshrl.u32 %v396, 7
      %v398 = vsub.s32 0, %v397
      %v399 = vrot.slane %v394, %v398
      %v400 = vlaneseq
      %v401 = vshrl.u32 %v400, 7
      %v402 = vsub.s32 1, %v401
      %v403 = vrot.slane %v394, %v402
      %v404 = vlaneseq
      %v405 = vshrl.u32 %v404, 7
      %v406 = vsub.s32 2, %v405
      %v407 = vrot.slane %v394, %v406
      %v411 = vmul.f32 %v382, %v399
      %v412 = vmul.f32 %v383, %v403
      %v413 = vmul.f32 %v384, %v407
      %v414 = vmul.f32 %v385, %v399
      %v415 = vmul.f32 %v386, %v403
      %v416 = vmul.f32 %v387, %v407
      %v417 = vmul.f32 %v388, %v399
      %v418 = vmul.f32 %v389, %v403
      %v419 = vmul.f32 %v390, %v407
      %v420 = vmul.f32 %v391, %v399
      %v421 = vmul.f32 %v392, %v403
      %v422 = vmul.f32 %v393, %v407
      %423 = vrot.lane.b32.xlu0 %v411, 19
      %v424 = vpop.permute.xlu0 %423
      %425 = vrot.lane.b32.xlu0 %v414, 19
      %v426 = vpop.permute.xlu0 %425
      %427 = vrot.lane.b32.xlu0 %v417, 19
      %v428 = vpop.permute.xlu0 %427
      %429 = vrot.lane.b32.xlu0 %v420, 19
      %v430 = vpop.permute.xlu0 %429
      %431 = vrot.lane.b32.xlu0 %v412, 19
      %v432 = vpop.permute.xlu0 %431
      %433 = vrot.lane.b32.xlu0 %v415, 19
      %v434 = vpop.permute.xlu0 %433
      %435 = vrot.lane.b32.xlu0 %v418, 19
      %v436 = vpop.permute.xlu0 %435
      %437 = vrot.lane.b32.xlu0 %v421, 19
      %v438 = vpop.permute.xlu0 %437
      %439 = vrot.lane.b32.xlu0 %v413, 19
      %v440 = vpop.permute.xlu0 %439
      %441 = vrot.lane.b32.xlu0 %v416, 19
      %v442 = vpop.permute.xlu0 %441
      %443 = vrot.lane.b32.xlu0 %v419, 19
      %v444 = vpop.permute.xlu0 %443
      %445 = vrot.lane.b32.xlu0 %v422, 19
      %v446 = vpop.permute.xlu0 %445
      %v447 = vlaneseq
      %v448 = vand.u32 %v447, 127
      %vm449 = vcmp.lt.s32.totalorder %v448, 19
      %v450 = vsel %vm449, %v432, %v440
      %v451 = vsel %vm449, %v434, %v442
      %v452 = vsel %vm449, %v436, %v444
      %v453 = vsel %vm449, %v438, %v446
      %v454 = vsel %vm449, %v424, %v432
      %v455 = vsel %vm449, %v426, %v434
      %v456 = vsel %vm449, %v428, %v436
      %v457 = vsel %vm449, %v430, %v438
      %v458 = vsel %vm449, %v440, %v424
      %v459 = vsel %vm449, %v442, %v426
      %v460 = vsel %vm449, %v444, %v428
      %v461 = vsel %vm449, %v446, %v430
      %462 = vrot.lane.b32.xlu0 %v411, 18
      %v463 = vpop.permute.xlu0 %462
      %464 = vrot.lane.b32.xlu0 %v414, 18
      %v465 = vpop.permute.xlu0 %464
      %466 = vrot.lane.b32.xlu0 %v417, 18
      %v467 = vpop.permute.xlu0 %466
      %468 = vrot.lane.b32.xlu0 %v420, 18
      %v469 = vpop.permute.xlu0 %468
      %470 = vrot.lane.b32.xlu0 %v412, 18
      %v471 = vpop.permute.xlu0 %470
      %472 = vrot.lane.b32.xlu0 %v415, 18
      %v473 = vpop.permute.xlu0 %472
      %474 = vrot.lane.b32.xlu0 %v418, 18
      %v475 = vpop.permute.xlu0 %474
      %476 = vrot.lane.b32.xlu0 %v421, 18
      %v477 = vpop.permute.xlu0 %476
      %478 = vrot.lane.b32.xlu0 %v413, 18
      %v479 = vpop.permute.xlu0 %478
      %480 = vrot.lane.b32.xlu0 %v416, 18
      %v481 = vpop.permute.xlu0 %480
      %482 = vrot.lane.b32.xlu0 %v419, 18
      %v483 = vpop.permute.xlu0 %482
      %484 = vrot.lane.b32.xlu0 %v422, 18
      %v485 = vpop.permute.xlu0 %484
      %vm486 = vcmp.lt.s32.totalorder %v448, 18
      %v487 = vsel %vm486, %v471, %v479
      %v488 = vsel %vm486, %v473, %v481
      %v489 = vsel %vm486, %v475, %v483
      %v490 = vsel %vm486, %v477, %v485
      %v491 = vsel %vm486, %v463, %v471
      %v492 = vsel %vm486, %v465, %v473
      %v493 = vsel %vm486, %v467, %v475
      %v494 = vsel %vm486, %v469, %v477
      %v495 = vsel %vm486, %v479, %v463
      %v496 = vsel %vm486, %v481, %v465
      %v497 = vsel %vm486, %v483, %v467
      %v498 = vsel %vm486, %v485, %v469
      %499 = vrot.lane.b32.xlu0 %v411, 17
      %v500 = vpop.permute.xlu0 %499
      %501 = vrot.lane.b32.xlu0 %v414, 17
      %v502 = vpop.permute.xlu0 %501
      %503 = vrot.lane.b32.xlu0 %v417, 17
      %v504 = vpop.permute.xlu0 %503
      %505 = vrot.lane.b32.xlu0 %v420, 17
      %v506 = vpop.permute.xlu0 %505
      %507 = vrot.lane.b32.xlu0 %v412, 17
      %v508 = vpop.permute.xlu0 %507
      %509 = vrot.lane.b32.xlu0 %v415, 17
      %v510 = vpop.permute.xlu0 %509
      %511 = vrot.lane.b32.xlu0 %v418, 17
      %v512 = vpop.permute.xlu0 %511
      %513 = vrot.lane.b32.xlu0 %v421, 17
      %v514 = vpop.permute.xlu0 %513
      %515 = vrot.lane.b32.xlu0 %v413, 17
      %v516 = vpop.permute.xlu0 %515
      %517 = vrot.lane.b32.xlu0 %v416, 17
      %v518 = vpop.permute.xlu0 %517
      %519 = vrot.lane.b32.xlu0 %v419, 17
      %v520 = vpop.permute.xlu0 %519
      %521 = vrot.lane.b32.xlu0 %v422, 17
      %v522 = vpop.permute.xlu0 %521
      %vm523 = vcmp.lt.s32.totalorder %v448, 17
      %v524 = vsel %vm523, %v508, %v516
      %v525 = vsel %vm523, %v510, %v518
      %v526 = vsel %vm523, %v512, %v520
      %v527 = vsel %vm523, %v514, %v522
      %v528 = vsel %vm523, %v500, %v508
      %v529 = vsel %vm523, %v502, %v510
      %v530 = vsel %vm523, %v504, %v512
      %v531 = vsel %vm523, %v506, %v514
      %v532 = vsel %vm523, %v516, %v500
      %v533 = vsel %vm523, %v518, %v502
      %v534 = vsel %vm523, %v520, %v504
      %v535 = vsel %vm523, %v522, %v506
      %536 = vrot.lane.b32.xlu0 %v411, 1
      %v537 = vpop.permute.xlu0 %536
      %538 = vrot.lane.b32.xlu0 %v414, 1
      %v539 = vpop.permute.xlu0 %538
      %540 = vrot.lane.b32.xlu0 %v417, 1
      %v541 = vpop.permute.xlu0 %540
      %542 = vrot.lane.b32.xlu0 %v420, 1
      %v543 = vpop.permute.xlu0 %542
      %544 = vrot.lane.b32.xlu0 %v412, 1
      %v545 = vpop.permute.xlu0 %544
      %546 = vrot.lane.b32.xlu0 %v415, 1
      %v547 = vpop.permute.xlu0 %546
      %548 = vrot.lane.b32.xlu0 %v418, 1
      %v549 = vpop.permute.xlu0 %548
      %550 = vrot.lane.b32.xlu0 %v421, 1
      %v551 = vpop.permute.xlu0 %550
      %552 = vrot.lane.b32.xlu0 %v413, 1
      %v553 = vpop.permute.xlu0 %552
      %554 = vrot.lane.b32.xlu0 %v416, 1
      %v555 = vpop.permute.xlu0 %554
      %556 = vrot.lane.b32.xlu0 %v419, 1
      %v557 = vpop.permute.xlu0 %556
      %558 = vrot.lane.b32.xlu0 %v422, 1
      %v559 = vpop.permute.xlu0 %558
      %vm560 = vcmp.lt.s32.totalorder %v448, 1
      %v561 = vsel %vm560, %v545, %v553
      %v562 = vsel %vm560, %v547, %v555
      %v563 = vsel %vm560, %v549, %v557
      %v564 = vsel %vm560, %v551, %v559
      %v565 = vsel %vm560, %v537, %v545
      %v566 = vsel %vm560, %v539, %v547
      %v567 = vsel %vm560, %v541, %v549
      %v568 = vsel %vm560, %v543, %v551
      %v569 = vsel %vm560, %v553, %v537
      %v570 = vsel %vm560, %v555, %v539
      %v571 = vsel %vm560, %v557, %v541
      %v572 = vsel %vm560, %v559, %v543
      %573 = vrot.lane.b32.xlu0 %v411, 127
      %v574 = vpop.permute.xlu0 %573
      %575 = vrot.lane.b32.xlu0 %v414, 127
      %v576 = vpop.permute.xlu0 %575
      %577 = vrot.lane.b32.xlu0 %v417, 127
      %v578 = vpop.permute.xlu0 %577
      %579 = vrot.lane.b32.xlu0 %v420, 127
      %v580 = vpop.permute.xlu0 %579
      %581 = vrot.lane.b32.xlu0 %v412, 127
      %v582 = vpop.permute.xlu0 %581
      %583 = vrot.lane.b32.xlu0 %v415, 127
      %v584 = vpop.permute.xlu0 %583
      %585 = vrot.lane.b32.xlu0 %v418, 127
      %v586 = vpop.permute.xlu0 %585
      %587 = vrot.lane.b32.xlu0 %v421, 127
      %v588 = vpop.permute.xlu0 %587
      %589 = vrot.lane.b32.xlu0 %v413, 127
      %v590 = vpop.permute.xlu0 %589
      %591 = vrot.lane.b32.xlu0 %v416, 127
      %v592 = vpop.permute.xlu0 %591
      %593 = vrot.lane.b32.xlu0 %v419, 127
      %v594 = vpop.permute.xlu0 %593
      %595 = vrot.lane.b32.xlu0 %v422, 127
      %v596 = vpop.permute.xlu0 %595
      %vm597 = vcmp.lt.s32.totalorder %v448, 127
      %v598 = vsel %vm597, %v582, %v590
      %v599 = vsel %vm597, %v584, %v592
      %v600 = vsel %vm597, %v586, %v594
      %v601 = vsel %vm597, %v588, %v596
      %v602 = vsel %vm597, %v574, %v582
      %v603 = vsel %vm597, %v576, %v584
      %v604 = vsel %vm597, %v578, %v586
      %v605 = vsel %vm597, %v580, %v588
      %v606 = vsel %vm597, %v590, %v574
      %v607 = vsel %vm597, %v592, %v576
      %v608 = vsel %vm597, %v594, %v578
      %v609 = vsel %vm597, %v596, %v580
      %610 = vrot.lane.b32.xlu0 %v411, 111
      %v611 = vpop.permute.xlu0 %610
      %612 = vrot.lane.b32.xlu0 %v414, 111
      %v613 = vpop.permute.xlu0 %612
      %614 = vrot.lane.b32.xlu0 %v417, 111
      %v615 = vpop.permute.xlu0 %614
      %616 = vrot.lane.b32.xlu0 %v420, 111
      %v617 = vpop.permute.xlu0 %616
      %618 = vrot.lane.b32.xlu0 %v412, 111
      %v619 = vpop.permute.xlu0 %618
      %620 = vrot.lane.b32.xlu0 %v415, 111
      %v621 = vpop.permute.xlu0 %620
      %622 = vrot.lane.b32.xlu0 %v418, 111
      %v623 = vpop.permute.xlu0 %622
      %624 = vrot.lane.b32.xlu0 %v421, 111
      %v625 = vpop.permute.xlu0 %624
      %626 = vrot.lane.b32.xlu0 %v413, 111
      %v627 = vpop.permute.xlu0 %626
      %628 = vrot.lane.b32.xlu0 %v416, 111
      %v629 = vpop.permute.xlu0 %628
      %630 = vrot.lane.b32.xlu0 %v419, 111
      %v631 = vpop.permute.xlu0 %630
      %632 = vrot.lane.b32.xlu0 %v422, 111
      %v633 = vpop.permute.xlu0 %632
      %vm634 = vcmp.lt.s32.totalorder %v448, 111
      %v635 = vsel %vm634, %v619, %v627
      %v636 = vsel %vm634, %v621, %v629
      %v637 = vsel %vm634, %v623, %v631
      %v638 = vsel %vm634, %v625, %v633
      %v639 = vsel %vm634, %v611, %v619
      %v640 = vsel %vm634, %v613, %v621
      %v641 = vsel %vm634, %v615, %v623
      %v642 = vsel %vm634, %v617, %v625
      %v643 = vsel %vm634, %v627, %v611
      %v644 = vsel %vm634, %v629, %v613
      %v645 = vsel %vm634, %v631, %v615
      %v646 = vsel %vm634, %v633, %v617
      %647 = vrot.lane.b32.xlu0 %v411, 110
      %v648 = vpop.permute.xlu0 %647
      %649 = vrot.lane.b32.xlu0 %v414, 110
      %v650 = vpop.permute.xlu0 %649
      %651 = vrot.lane.b32.xlu0 %v417, 110
      %v652 = vpop.permute.xlu0 %651
      %653 = vrot.lane.b32.xlu0 %v420, 110
      %v654 = vpop.permute.xlu0 %653
      %655 = vrot.lane.b32.xlu0 %v412, 110
      %v656 = vpop.permute.xlu0 %655
      %657 = vrot.lane.b32.xlu0 %v415, 110
      %v658 = vpop.permute.xlu0 %657
      %659 = vrot.lane.b32.xlu0 %v418, 110
      %v660 = vpop.permute.xlu0 %659
      %661 = vrot.lane.b32.xlu0 %v421, 110
      %v662 = vpop.permute.xlu0 %661
      %663 = vrot.lane.b32.xlu0 %v413, 110
      %v664 = vpop.permute.xlu0 %663
      %665 = vrot.lane.b32.xlu0 %v416, 110
      %v666 = vpop.permute.xlu0 %665
      %667 = vrot.lane.b32.xlu0 %v419, 110
      %v668 = vpop.permute.xlu0 %667
      %669 = vrot.lane.b32.xlu0 %v422, 110
      %v670 = vpop.permute.xlu0 %669
      %vm671 = vcmp.lt.s32.totalorder %v448, 110
      %v672 = vsel %vm671, %v656, %v664
      %v673 = vsel %vm671, %v658, %v666
      %v674 = vsel %vm671, %v660, %v668
      %v675 = vsel %vm671, %v662, %v670
      %v676 = vsel %vm671, %v648, %v656
      %v677 = vsel %vm671, %v650, %v658
      %v678 = vsel %vm671, %v652, %v660
      %v679 = vsel %vm671, %v654, %v662
      %v680 = vsel %vm671, %v664, %v648
      %v681 = vsel %vm671, %v666, %v650
      %v682 = vsel %vm671, %v668, %v652
      %v683 = vsel %vm671, %v670, %v654
      %684 = vrot.lane.b32.xlu0 %v411, 109
      %v685 = vpop.permute.xlu0 %684
      %686 = vrot.lane.b32.xlu0 %v414, 109
      %v687 = vpop.permute.xlu0 %686
      %688 = vrot.lane.b32.xlu0 %v417, 109
      %v689 = vpop.permute.xlu0 %688
      %690 = vrot.lane.b32.xlu0 %v420, 109
      %v691 = vpop.permute.xlu0 %690
      %692 = vrot.lane.b32.xlu0 %v412, 109
      %v693 = vpop.permute.xlu0 %692
      %694 = vrot.lane.b32.xlu0 %v415, 109
      %v695 = vpop.permute.xlu0 %694
      %696 = vrot.lane.b32.xlu0 %v418, 109
      %v697 = vpop.permute.xlu0 %696
      %698 = vrot.lane.b32.xlu0 %v421, 109
      %v699 = vpop.permute.xlu0 %698
      %700 = vrot.lane.b32.xlu0 %v413, 109
      %v701 = vpop.permute.xlu0 %700
      %702 = vrot.lane.b32.xlu0 %v416, 109
      %v703 = vpop.permute.xlu0 %702
      %704 = vrot.lane.b32.xlu0 %v419, 109
      %v705 = vpop.permute.xlu0 %704
      %706 = vrot.lane.b32.xlu0 %v422, 109
      %v707 = vpop.permute.xlu0 %706
      %vm708 = vcmp.lt.s32.totalorder %v448, 109
      %v709 = vsel %vm708, %v693, %v701
      %v710 = vsel %vm708, %v695, %v703
      %v711 = vsel %vm708, %v697, %v705
      %v712 = vsel %vm708, %v699, %v707
      %v713 = vsel %vm708, %v685, %v693
      %v714 = vsel %vm708, %v687, %v695
      %v715 = vsel %vm708, %v689, %v697
      %v716 = vsel %vm708, %v691, %v699
      %v717 = vsel %vm708, %v701, %v685
      %v718 = vsel %vm708, %v703, %v687
      %v719 = vsel %vm708, %v705, %v689
      %v720 = vsel %vm708, %v707, %v691
      %v721 = vpack.c.bf16 %v459, %v458
      %v722 = vpack.c.bf16 %v455, %v454
      %v723 = vpack.c.bf16 %v451, %v450
      %v724 = vpack.c.bf16 %v461, %v460
      %v725 = vpack.c.bf16 %v457, %v456
      %v726 = vpack.c.bf16 %v453, %v452
      %v727 = vpack.c.bf16 %v496, %v495
      %v728 = vpack.c.bf16 %v492, %v491
      %v729 = vpack.c.bf16 %v488, %v487
      %v730 = vpack.c.bf16 %v498, %v497
      %v731 = vpack.c.bf16 %v494, %v493
      %v732 = vpack.c.bf16 %v490, %v489
      %v733 = vpack.c.bf16 %v533, %v532
      %v734 = vpack.c.bf16 %v529, %v528
      %v735 = vpack.c.bf16 %v525, %v524
      %v736 = vpack.c.bf16 %v535, %v534
      %v737 = vpack.c.bf16 %v531, %v530
      %v738 = vpack.c.bf16 %v527, %v526
      %v739 = vpack.c.bf16 %v570, %v569
      %v740 = vpack.c.bf16 %v566, %v565
      %v741 = vpack.c.bf16 %v562, %v561
      %v742 = vpack.c.bf16 %v572, %v571
      %v743 = vpack.c.bf16 %v568, %v567
      %v744 = vpack.c.bf16 %v564, %v563
      %v745 = vpack.c.bf16 %v414, %v411
      %v746 = vpack.c.bf16 %v415, %v412
      %v747 = vpack.c.bf16 %v416, %v413
      %v748 = vpack.c.bf16 %v420, %v417
      %v749 = vpack.c.bf16 %v421, %v418
      %v750 = vpack.c.bf16 %v422, %v419
      %v751 = vpack.c.bf16 %v603, %v602
      %v752 = vpack.c.bf16 %v599, %v598
      %v753 = vpack.c.bf16 %v607, %v606
      %v754 = vpack.c.bf16 %v605, %v604
      %v755 = vpack.c.bf16 %v601, %v600
      %v756 = vpack.c.bf16 %v609, %v608
      %v757 = vpack.c.bf16 %v640, %v639
      %v758 = vpack.c.bf16 %v636, %v635
      %v759 = vpack.c.bf16 %v644, %v643
      %v760 = vpack.c.bf16 %v642, %v641
      %v761 = vpack.c.bf16 %v638, %v637
      %v762 = vpack.c.bf16 %v646, %v645
      %v763 = vpack.c.bf16 %v677, %v676
      %v764 = vpack.c.bf16 %v673, %v672
      %v765 = vpack.c.bf16 %v681, %v680
      %v766 = vpack.c.bf16 %v679, %v678
      %v767 = vpack.c.bf16 %v675, %v674
      %v768 = vpack.c.bf16 %v683, %v682
      %v769 = vpack.c.bf16 %v714, %v713
      %v770 = vpack.c.bf16 %v710, %v709
      %v771 = vpack.c.bf16 %v718, %v717
      %v772 = vpack.c.bf16 %v716, %v715
      %v773 = vpack.c.bf16 %v712, %v711
      %v774 = vpack.c.bf16 %v720, %v719
      %v775 = vld [vmem:[%s2] sm:$0x3f]
      %v777 = vcombine.high %v775, %v775
      %v779 = vunpack.c.l.s4 1983009808
      %v780 = vunpack.c.0.s8 %v779
      %v781 = vlaneseq
      %v782 = vshrl.u32 %v781, 7
      %v783 = vsub.s32 %v780, %v782
      %v784 = vrot.slane %v775, %v783
      %v786 = vunpack.c.l.s4 1983009808
      %v787 = vunpack.c.0.s8 %v786
      %v788 = vlaneseq
      %v789 = vshrl.u32 %v788, 7
      %v790 = vsub.s32 %v787, %v789
      %v791 = vrot.slane %v777, %v790
      %v792 = vcombine.high %v784, %v784
      %vm795 = vcmask 261120
      %v797 = vsel %vm795, %v791, 0
      %799 = vmatprep.subr.bf16.mxu0 %v743
      %800 = vmatpush1.bf16.msra.mxu0 %v742
      %801 = vmatprep.subr.bf16.mxu0 %v740
      %802 = vmatpush1.bf16.msra.mxu0 %v739
      %803 = vmatprep.subr.bf16.mxu0 %v737
      %804 = vmatpush1.bf16.msra.mxu0 %v736
      %805 = vmatprep.subr.bf16.mxu0 %v734
      %806 = vmatpush1.bf16.msra.mxu0 %v733
      %807 = vmatprep.subr.bf16.mxu0 %v731
      %808 = vmatpush1.bf16.msra.mxu0 %v730
      %809 = vmatprep.subr.bf16.mxu0 %v728
      %810 = vmatpush1.bf16.msra.mxu0 %v727
      %811 = vmatprep.subr.bf16.mxu0 %v725
      %812 = vmatpush1.bf16.msra.mxu0 %v724
      %813 = vmatprep.subr.bf16.mxu0 %v722
      %814 = vmatpush1.bf16.msra.mxu0 %v721
      %815 = vmatprep.subr.bf16.mxu0 %v767
      %816 = vmatpush2.bf16.msra.mxu0 %v766
      %817 = vmatprep.subr.bf16.mxu0 %v764
      %818 = vmatpush2.bf16.msra.mxu0 %v763
      %819 = vmatprep.subr.bf16.mxu0 %v761
      %820 = vmatpush2.bf16.msra.mxu0 %v760
      %821 = vmatprep.subr.bf16.mxu0 %v758
      %822 = vmatpush2.bf16.msra.mxu0 %v757
      %823 = vmatprep.subr.bf16.mxu0 %v755
      %824 = vmatpush2.bf16.msra.mxu0 %v754
      %825 = vmatprep.subr.bf16.mxu0 %v752
      %826 = vmatpush2.bf16.msra.mxu0 %v751
      %827 = vmatprep.subr.bf16.mxu0 %v749
      %828 = vmatpush2.bf16.msra.mxu0 %v748
      %829 = vmatprep.subr.bf16.mxu0 %v746
      %830 = vmatpush2.bf16.msra.mxu0 %v745
      %831 = vmatprep.mubr.bf16.mxu0 %v792
      %832 = vmatmul.mubr.bf16.gmra.mxu0 %v784
      %v833 = vpop.f32.mrf.mxu0
      %v834 = vadd.f32 0.0, %v833
      %v835 = vpop.f32.mrf.mxu0
      %v836 = vadd.f32 0.0, %v835
      %v837 = vpop.f32.mrf.mxu0
      %v838 = vpop.f32.mrf.mxu0
      %839 = vdwg.mxu0
      %840 = vmatprep.subr.bf16.mxu0 0
      %841 = vmatpush1.bf16.msra.mxu0 0
      %842 = vmatprep.subr.bf16.mxu0 0
      %843 = vmatpush1.bf16.msra.mxu0 0
      %844 = vmatprep.subr.bf16.mxu0 0
      %845 = vmatpush1.bf16.msra.mxu0 0
      %846 = vmatprep.subr.bf16.mxu0 0
      %847 = vmatpush1.bf16.msra.mxu0 0
      %848 = vmatprep.subr.bf16.mxu0 0
      %849 = vmatpush1.bf16.msra.mxu0 0
      %850 = vmatprep.subr.bf16.mxu0 0
      %851 = vmatpush1.bf16.msra.mxu0 0
      %852 = vmatprep.subr.bf16.mxu0 %v773
      %853 = vmatpush1.bf16.msra.mxu0 %v772
      %854 = vmatprep.subr.bf16.mxu0 %v770
      %855 = vmatpush1.bf16.msra.mxu0 %v769
      %856 = vmatprep.subr.bf16.mxu0 0
      %857 = vmatpush2.bf16.msra.mxu0 0
      %858 = vmatprep.subr.bf16.mxu0 0
      %859 = vmatpush2.bf16.msra.mxu0 0
      %860 = vmatprep.subr.bf16.mxu0 0
      %861 = vmatpush2.bf16.msra.mxu0 0
      %862 = vmatprep.subr.bf16.mxu0 0
      %863 = vmatpush2.bf16.msra.mxu0 0
      %864 = vmatprep.subr.bf16.mxu0 0
      %865 = vmatpush2.bf16.msra.mxu0 0
      %866 = vmatprep.subr.bf16.mxu0 0
      %867 = vmatpush2.bf16.msra.mxu0 0
      %868 = vmatprep.subr.bf16.mxu0 0
      %869 = vmatpush2.bf16.msra.mxu0 0
      %870 = vmatprep.subr.bf16.mxu0 0
      %871 = vmatpush2.bf16.msra.mxu0 0
      %872 = vmatprep.mubr.bf16.mxu0 0
      %873 = vmatmul.mubr.bf16.gmra.mxu0 %v797
      %v874 = vpop.f32.mrf.mxu0
      %v875 = vadd.f32 %v834, %v874
      %v876 = vpop.f32.mrf.mxu0
      %v877 = vadd.f32 %v836, %v876
      %v878 = vpop.f32.mrf.mxu0
      %v879 = vpop.f32.mrf.mxu0
      %880 = vdwg.mxu0
      %881 = vmatprep.subr.bf16.mxu0 0
      %882 = vmatpush1.bf16.msra.mxu0 %v744
      %883 = vmatprep.subr.bf16.mxu0 0
      %884 = vmatpush1.bf16.msra.mxu0 %v741
      %885 = vmatprep.subr.bf16.mxu0 0
      %886 = vmatpush1.bf16.msra.mxu0 %v738
      %887 = vmatprep.subr.bf16.mxu0 0
      %888 = vmatpush1.bf16.msra.mxu0 %v735
      %889 = vmatprep.subr.bf16.mxu0 0
      %890 = vmatpush1.bf16.msra.mxu0 %v732
      %891 = vmatprep.subr.bf16.mxu0 0
      %892 = vmatpush1.bf16.msra.mxu0 %v729
      %893 = vmatprep.subr.bf16.mxu0 0
      %894 = vmatpush1.bf16.msra.mxu0 %v726
      %895 = vmatprep.subr.bf16.mxu0 0
      %896 = vmatpush1.bf16.msra.mxu0 %v723
      %897 = vmatprep.subr.bf16.mxu0 0
      %898 = vmatpush2.bf16.msra.mxu0 %v768
      %899 = vmatprep.subr.bf16.mxu0 0
      %900 = vmatpush2.bf16.msra.mxu0 %v765
      %901 = vmatprep.subr.bf16.mxu0 0
      %902 = vmatpush2.bf16.msra.mxu0 %v762
      %903 = vmatprep.subr.bf16.mxu0 0
      %904 = vmatpush2.bf16.msra.mxu0 %v759
      %905 = vmatprep.subr.bf16.mxu0 0
      %906 = vmatpush2.bf16.msra.mxu0 %v756
      %907 = vmatprep.subr.bf16.mxu0 0
      %908 = vmatpush2.bf16.msra.mxu0 %v753
      %909 = vmatprep.subr.bf16.mxu0 0
      %910 = vmatpush2.bf16.msra.mxu0 %v750
      %911 = vmatprep.subr.bf16.mxu0 0
      %912 = vmatpush2.bf16.msra.mxu0 %v747
      %913 = vmatprep.mubr.bf16.mxu0 %v792
      %914 = vmatmul.mubr.bf16.gmra.mxu0 %v784
      %v915 = vpop.f32.mrf.mxu0
      %v916 = vadd.f32 0.0, %v915
      %v917 = vpop.f32.mrf.mxu0
      %v918 = vpop.f32.mrf.mxu0
      %v919 = vpop.f32.mrf.mxu0
      %920 = vdwg.mxu0
      %921 = vmatprep.subr.bf16.mxu0 0
      %922 = vmatpush1.bf16.msra.mxu0 0
      %923 = vmatprep.subr.bf16.mxu0 0
      %924 = vmatpush1.bf16.msra.mxu0 0
      %925 = vmatprep.subr.bf16.mxu0 0
      %926 = vmatpush1.bf16.msra.mxu0 0
      %927 = vmatprep.subr.bf16.mxu0 0
      %928 = vmatpush1.bf16.msra.mxu0 0
      %929 = vmatprep.subr.bf16.mxu0 0
      %930 = vmatpush1.bf16.msra.mxu0 0
      %931 = vmatprep.subr.bf16.mxu0 0
      %932 = vmatpush1.bf16.msra.mxu0 0
      %933 = vmatprep.subr.bf16.mxu0 0
      %934 = vmatpush1.bf16.msra.mxu0 %v774
      %935 = vmatprep.subr.bf16.mxu0 0
      %936 = vmatpush1.bf16.msra.mxu0 %v771
      %937 = vmatprep.subr.bf16.mxu0 0
      %938 = vmatpush2.bf16.msra.mxu0 0
      %939 = vmatprep.subr.bf16.mxu0 0
      %940 = vmatpush2.bf16.msra.mxu0 0
      %941 = vmatprep.subr.bf16.mxu0 0
      %942 = vmatpush2.bf16.msra.mxu0 0
      %943 = vmatprep.subr.bf16.mxu0 0
      %944 = vmatpush2.bf16.msra.mxu0 0
      %945 = vmatprep.subr.bf16.mxu0 0
      %946 = vmatpush2.bf16.msra.mxu0 0
      %947 = vmatprep.subr.bf16.mxu0 0
      %948 = vmatpush2.bf16.msra.mxu0 0
      %949 = vmatprep.subr.bf16.mxu0 0
      %950 = vmatpush2.bf16.msra.mxu0 0
      %951 = vmatprep.subr.bf16.mxu0 0
      %952 = vmatpush2.bf16.msra.mxu0 0
      %953 = vmatprep.mubr.bf16.mxu0 0
      %954 = vmatmul.mubr.bf16.gmra.mxu0 %v797
      %v955 = vpop.f32.mrf.mxu0
      %v956 = vadd.f32 %v916, %v955
      %v957 = vpop.f32.mrf.mxu0
      %v958 = vpop.f32.mrf.mxu0
      %v959 = vpop.f32.mrf.mxu0
      %960 = vdwg.mxu0
      %v963 = vcombine.low %v875, %v877
      %965 = vst [vmem:[%s197] sm:$0xff] %v963
      %966 = vst [vmem:[%s197 + $0x8] sm:$0xf] %v956
      %p967 = scmp.lt.s32.totalorder %s15, 1
      %s968 = scalar_select %p967, %s15, 1
      %s969 = smul.addr %s968, 3
      %s970 = smul.addr %s969, 4
      %s971 = scalar_lea.vmem %s4, %s970
      // Predicated region
      $region37: #{_lambda_.1} parent=35 // pred_check
        %p972 = pneg %p122
      $region38: #{_lambda_.1} parent=35 // pred_check_branch
        %974 = sbr.rel (%p972) target = $region40
      $region39: #{_lambda_.1} parent=35 // pred_region
        _
      $region40: #{_lambda_.1} parent=35 // pred_fallthru
        _
    $region36: #{_lambda_.1} parent=5 // pred_fallthru
      _
    %p975 = scmp.le.s32.totalorder 2, %s10
    // Predicated region
    $region41: #{_lambda_.1} parent=5 // pred_check
      %p976 = pneg %p975
    $region42: #{_lambda_.1} parent=5 // pred_check_branch
      %978 = sbr.rel (%p976) target = $region44
    $region43: #{_lambda_.1} parent=5 // pred_region
      %s979 = ssub.s32 %s10, 2
      // Predicated region
      $region45: #{_lambda_.1} parent=43 // pred_check
        %p980 = pneg %p128
      $region46: #{_lambda_.1} parent=43 // pred_check_branch
        %982 = sbr.rel (%p980) target = $region48
      $region47: #{_lambda_.1} parent=43 // pred_region
        %p983 = scmp.lt.s32.totalorder %s16, 1
        %s984 = scalar_select %p983, %s16, 1
        %s985 = smul.addr %s984, 3
        %s986 = smul.addr %s985, 4
        %s987 = scalar_lea.vmem %s4, %s986
      $region48: #{_lambda_.1} parent=43 // pred_fallthru
        _
    $region44: #{_lambda_.1} parent=5 // pred_fallthru
      _
  $region6: #{_lambda_.1} parent=0 // loop_footer
    %s14 = sadd.s32 1, %s10
  $region7: #{_lambda_.1} parent=0 // loop_footer_branch
    %9 = sbr.rel target = $region3
  $region8: #{_lambda_.1} parent=0 // loop_exit
    _

</llo_original>
